<compile_context>
chip_gen: v7x
topology: tpu7x:2x2x1
jax: 0.10.0
libtpu: 0.0.40
codegen_flags: <defaults>
</compile_context>

<pallas_src>
import jax
import jax.numpy as jnp
from jax.experimental import pallas as pl
from jax.experimental.pallas import tpu as pltpu


# ---------------------------------------------------------------------------
# Kernels
# ---------------------------------------------------------------------------

def _lora_1x1_kernel(x_ref, wd_ref, wu_ref, o_ref):
    # x_ref : (1, C_in, t)  activation tile (native dtype; on the default fast
    #                        path compute dtype == native dtype -> cast is a no-op)
    # wd_ref: (rank, C_in)  down-projection weight (compute dtype)
    # wu_ref: (C_out, rank) up-projection weight, alpha/rank folded in (compute dtype)
    # o_ref : (1, C_out, t) output tile (original input dtype)
    x = x_ref[0]
    if x.dtype != wd_ref.dtype:                      # static trace-time branch
        x = x.astype(wd_ref.dtype)
    h = jnp.dot(wd_ref[...], x, preferred_element_type=jnp.float32)      # (rank, t)
    y = jnp.dot(wu_ref[...], h.astype(wu_ref.dtype),
                preferred_element_type=jnp.float32)                      # (C_out, t)
    o_ref[0] = y.astype(o_ref.dtype)


def _lora_1x1_add_kernel(x_ref, base_ref, wd_ref, wu_ref, o_ref):
    # Same as above plus a fused residual add of the base-conv output tile.
    x = x_ref[0]
    if x.dtype != wd_ref.dtype:
        x = x.astype(wd_ref.dtype)
    h = jnp.dot(wd_ref[...], x, preferred_element_type=jnp.float32)
    y = jnp.dot(wu_ref[...], h.astype(wu_ref.dtype),
                preferred_element_type=jnp.float32)
    o_ref[0] = (base_ref[0].astype(jnp.float32) + y).astype(o_ref.dtype)


# ---------------------------------------------------------------------------
# Generation-aware VMEM budgeting & spatial-tile selection
# ---------------------------------------------------------------------------

def _vmem_budgets():
    """Returns (tile budget bytes, vmem_limit_bytes) from the chip's VMEM size.

    v5e/v6e (128 MiB) -> ~88 MiB tile budget, ~102 MiB scoped limit.
    v7x (64 MiB/TC)   -> ~43 MiB tile budget, ~51 MiB scoped limit.
    """
    try:
        cap = int(pltpu.get_tpu_info().vmem_capacity_bytes)
    except Exception:
        cap = 64 * 1024 * 1024                 # conservative fallback (v7x per-TC)
    budget = int(0.70 * cap) - 2 * 1024 * 1024  # headroom for weights / internal scratch
    limit = int(0.80 * cap)
    return max(budget, 4 * 1024 * 1024), limit


def _choose_spatial_tile(p128, per_col_bytes, budget_bytes, n_batch):
    """Largest multiple-of-128 divisor t of p128 whose per-tile footprint fits
    the budget, keeping >= 2 total grid units when the batch alone doesn't
    provide them (so v7x's two TensorCores both get work)."""
    m = p128 // 128
    max_units = max(budget_bytes // max(per_col_bytes * 128, 1), 1)
    min_spatial_tiles = 1 if n_batch >= 2 else 2
    best = 0
    for d in range(1, m + 1):
        if m % d == 0 and d <= max_units and (m // d) >= min_spatial_tiles:
            best = d
    if best == 0:  # parallel-split constraint infeasible (e.g. p128 == 128)
        for d in range(1, m + 1):
            if m % d == 0 and d <= max_units:
                best = d
    return best * 128


# ---------------------------------------------------------------------------
# Wrapper
# ---------------------------------------------------------------------------

def lora_conv2d_forward(x_nchw, w_down, w_up, network_alpha=None, base=None,
                        compute_in_weight_dtype=False):
    """Pallas forward pass of LoRAConv2dLayer (1x1 conv / stride 1 / pad 0).

    x_nchw : (N, C_in, H, W)     any float dtype (result cast back to it)
    w_down : (rank, C_in, 1, 1)  PyTorch Conv2d weight layout
    w_up   : (C_out, rank, 1, 1)
    base   : optional (N, C_out, H, W) tensor fused as `base + lora(x)` in the
             kernel epilogue (saves one full HBM round trip downstream).
    compute_in_weight_dtype : if True, match torch's "compute in weight dtype"
             exactly (activation tile is cast up in-kernel). Default False
             streams activations natively and casts the tiny weights instead.
    """
    orig_dtype = x_nchw.dtype
    N, C_in, H, W = x_nchw.shape
    rank = w_down.shape[0]
    C_out = w_up.shape[0]
    P = H * W

    scale = 1.0 if network_alpha is None else float(network_alpha) / float(rank)
    compute_dtype = w_down.dtype if compute_in_weight_dtype else orig_dtype

    # Weights as plain matrices; fold alpha/rank into the up weight (in f32),
    # then cast both to the compute dtype (tiny arrays -> negligible cost).
    wd = w_down.reshape(rank, C_in).astype(compute_dtype)
    wu = (w_up.reshape(C_out, rank).astype(jnp.float32) * jnp.float32(scale)
          ).astype(compute_dtype)

    out_dtype = orig_dtype if base is None else base.dtype

    # Keep NCHW; merging (H, W) -> H*W is a free reshape and makes the lane
    # (fast) axis the spatial axis: lane-dense loads and stores.
    x3d = x_nchw.reshape(N, C_in, P)
    base3d = None if base is None else base.reshape(N, C_out, P)

    x_bytes = jnp.dtype(x_nchw.dtype).itemsize
    o_bytes = jnp.dtype(out_dtype).itemsize
    c_bytes = jnp.dtype(compute_dtype).itemsize
    b_bytes = 0 if base is None else jnp.dtype(base.dtype).itemsize

    # Per-spatial-column VMEM cost: double-buffered I/O + in-kernel temporaries.
    per_col = (2 * C_in * x_bytes            # x        (pipelined, 2 buffers)
               + 2 * C_out * o_bytes         # output   (pipelined, 2 buffers)
               + 2 * C_out * b_bytes         # base     (pipelined, optional)
               + rank * 4 + C_out * 4        # h, y     (f32 temporaries)
               + C_out * o_bytes)            # cast-to-output temporary
    if compute_dtype != x_nchw.dtype:
        per_col += C_in * c_bytes            # in-kernel upcast copy of x

    budget, vmem_limit = _vmem_budgets()

    pad = 0
    if P % 128 == 0:
        t = _choose_spatial_tile(P, per_col, budget, N)
    elif per_col * P <= budget:
        # Ragged spatial extent small enough for a single full-extent block:
        # block last dim == full array dim satisfies the (8,128) rule; no pad.
        t = P
    else:
        # Ragged AND large (rare for diffusion latents): pad to a multiple of 128.
        p128 = ((P + 127) // 128) * 128
        pad = p128 - P
        x3d = jnp.pad(x3d, ((0, 0), (0, 0), (0, pad)))
        if base3d is not None:
            base3d = jnp.pad(base3d, ((0, 0), (0, 0), (0, pad)))
        t = _choose_spatial_tile(p128, per_col, budget, N)

    P_eff = P + pad
    grid = (N, P_eff // t)

    cost = pl.CostEstimate(
        flops=2 * rank * (C_in + C_out) * N * P_eff,
        bytes_accessed=(N * P_eff * (C_in * x_bytes + C_out * (o_bytes + b_bytes))
                        + (rank * C_in + C_out * rank) * c_bytes),
        transcendentals=0,
    )

    x_spec = pl.BlockSpec((1, C_in, t), lambda n, p: (n, 0, p))
    wd_spec = pl.BlockSpec((rank, C_in), lambda n, p: (0, 0))
    wu_spec = pl.BlockSpec((C_out, rank), lambda n, p: (0, 0))
    o_spec = pl.BlockSpec((1, C_out, t), lambda n, p: (n, 0, p))

    params = pltpu.CompilerParams(
        dimension_semantics=("parallel", "parallel"),
        vmem_limit_bytes=vmem_limit,
    )

    if base3d is None:
        out3d = pl.pallas_call(
            _lora_1x1_kernel,
            out_shape=jax.ShapeDtypeStruct((N, C_out, P_eff), out_dtype),
            grid=grid,
            in_specs=[x_spec, wd_spec, wu_spec],
            out_specs=o_spec,
            compiler_params=params,
            cost_estimate=cost,
        )(x3d, wd, wu)
    else:
        base_spec = pl.BlockSpec((1, C_out, t), lambda n, p: (n, 0, p))
        out3d = pl.pallas_call(
            _lora_1x1_add_kernel,
            out_shape=jax.ShapeDtypeStruct((N, C_out, P_eff), out_dtype),
            grid=grid,
            in_specs=[x_spec, base_spec, wd_spec, wu_spec],
            out_specs=o_spec,
            compiler_params=params,
            cost_estimate=cost,
        )(x3d, base3d, wd, wu)

    if pad:
        out3d = out3d[:, :, :P]
    return out3d.reshape(N, C_out, H, W)


# ---------------------------------------------------------------------------
# Pure-JAX reference (mirrors the torch module: compute in weight dtype)
# ---------------------------------------------------------------------------

def _reference_forward(x_nchw, w_down, w_up, network_alpha=None):
    orig_dtype = x_nchw.dtype
    rank = w_down.shape[0]
    x = x_nchw.astype(w_down.dtype)
    wd = w_down.reshape(rank, x.shape[1])            # (rank, C_in)
    wu = w_up.reshape(w_up.shape[0], rank)           # (C_out, rank)
    h = jnp.einsum("nchw,rc->nrhw", x, wd)
    y = jnp.einsum("nrhw,or->nohw", h, wu)
    if network_alpha is not None:
        y = y * (network_alpha / rank)
    return y.astype(orig_dtype)


if __name__ == "__main__":
    # Module config (defaults of LoRAConv2dLayer except explicit alpha).
    in_features = 4
    out_features = 8
    rank = 4
    network_alpha = 8.0

    key = jax.random.PRNGKey(0)
    k_x, k_down, k_up, k_base = jax.random.split(key, 4)

    # Deterministic parameter init mirroring the module's __init__:
    #   nn.init.normal_(down.weight, std=1/rank); nn.init.zeros_(up.weight)
    w_down = (1.0 / rank) * jax.random.normal(
        k_down, (rank, in_features, 1, 1), dtype=jnp.float32
    )
    w_up_zero = jnp.zeros((out_features, rank, 1, 1), dtype=jnp.float32)
    w_up = 0.1 * jax.random.normal(
        k_up, (out_features, rank, 1, 1), dtype=jnp.float32
    )

    # Input: NCHW, batch=2, channels=4, spatial=16x16.
    x = jax.random.normal(k_x, (2, in_features, 16, 16), dtype=jnp.float32)

    # 1) Module's own init (up == 0 -> zero output, as in torch).
    out = lora_conv2d_forward(x, w_down, w_up_zero, network_alpha)
    jax.block_until_ready(out)
    ref = _reference_forward(x, w_down, w_up_zero, network_alpha)
    assert out.shape == (2, out_features, 16, 16)
    assert out.dtype == x.dtype
    assert jnp.allclose(out, ref, atol=1e-5, rtol=1e-5)

    # 2) Non-zero up weights (exercises the fused rank-bottleneck matmuls).
    out_nz = lora_conv2d_forward(x, w_down, w_up, network_alpha)
    jax.block_until_ready(out_nz)
    ref_nz = _reference_forward(x, w_down, w_up, network_alpha)
    assert jnp.allclose(out_nz, ref_nz, atol=1e-4, rtol=1e-4)

    # 3) Multi-tile spatial path (N=1 forces a >=2-tile split; 1024 -> 2x512).
    x_big = jax.random.normal(k_x, (1, in_features, 32, 32), dtype=jnp.float32)
    out_big = lora_conv2d_forward(x_big, w_down, w_up, network_alpha)
    jax.block_until_ready(out_big)
    ref_big = _reference_forward(x_big, w_down, w_up, network_alpha)
    assert out_big.shape == (1, out_features, 32, 32)
    assert jnp.allclose(out_big, ref_big, atol=1e-4, rtol=1e-4)

    # 4) Ragged spatial extent (5x7 = 35 columns -> single full-extent block,
    #    no wrapper pad/slice).
    x_odd = jax.random.normal(k_x, (1, in_features, 5, 7), dtype=jnp.float32)
    out_odd = lora_conv2d_forward(x_odd, w_down, w_up, network_alpha)
    jax.block_until_ready(out_odd)
    ref_odd = _reference_forward(x_odd, w_down, w_up, network_alpha)
    assert out_odd.shape == (1, out_features, 5, 7)
    assert jnp.allclose(out_odd, ref_odd, atol=1e-4, rtol=1e-4)

    # 5) bf16 activations with f32 weights -> native-dtype streaming with the
    #    tiny weights cast to bf16 (accumulation stays f32).
    x_bf16 = x.astype(jnp.bfloat16)
    out_bf16 = lora_conv2d_forward(x_bf16, w_down, w_up, network_alpha)
    jax.block_until_ready(out_bf16)
    ref_bf16 = _reference_forward(x_bf16, w_down, w_up, network_alpha)
    assert out_bf16.dtype == jnp.bfloat16
    assert jnp.allclose(
        out_bf16.astype(jnp.float32), ref_bf16.astype(jnp.float32),
        atol=2e-2, rtol=2e-2,
    )

    # 6) Fused residual add (base + lora(x)) in the kernel epilogue.
    base = jax.random.normal(k_base, (2, out_features, 16, 16), dtype=jnp.float32)
    out_add = lora_conv2d_forward(x, w_down, w_up, network_alpha, base=base)
    jax.block_until_ready(out_add)
    ref_add = base + _reference_forward(x, w_down, w_up, network_alpha)
    assert jnp.allclose(out_add, ref_add, atol=1e-4, rtol=1e-4)

    # 7) Exact torch-semantics mode (compute in weight dtype) still matches.
    out_exact = lora_conv2d_forward(x_bf16, w_down, w_up, network_alpha,
                                    compute_in_weight_dtype=True)
    jax.block_until_ready(out_exact)
    assert out_exact.dtype == jnp.bfloat16
    assert jnp.allclose(
        out_exact.astype(jnp.float32), ref_bf16.astype(jnp.float32),
        atol=2e-2, rtol=2e-2,
    )

    print("KERNEL_OK")
</pallas_src>

<mosaic_0001>
module attributes {stable_mosaic.version = 11 : i64} {
  func.func @_lora_1x1_kernel(%arg0: i32, %arg1: i32, %arg2: memref<1x4x256xf32, #tpu.memory_space<vmem>>, %arg3: memref<4x4xf32, #tpu.memory_space<vmem>>, %arg4: memref<8x4xf32, #tpu.memory_space<vmem>>, %arg5: memref<1x8x256xf32, #tpu.memory_space<vmem>>) attributes {dimension_semantics = [#tpu.dimension_semantics<parallel>, #tpu.dimension_semantics<parallel>], iteration_bounds = array<i64: 2, 1>, scalar_prefetch = 0 : i64, scratch_operands = 0 : i64, tpu.core_type = #tpu.core_type<tc>, window_params = [{transform_indices = @transform_0, window_bounds = array<i64: 1, 4, 256>}, {pipeline_mode = #tpu.pipeline_mode<synchronous>, transform_indices = @transform_1, window_bounds = array<i64: 4, 4>}, {pipeline_mode = #tpu.pipeline_mode<synchronous>, transform_indices = @transform_2, window_bounds = array<i64: 8, 4>}, {transform_indices = @transform_3, window_bounds = array<i64: 1, 8, 256>}]} {
    %c0 = arith.constant 0 : index
    %c0_0 = arith.constant 0 : index
    %c0_1 = arith.constant 0 : index
    %0 = vector.load %arg2[%c0, %c0_0, %c0_1] : memref<1x4x256xf32, #tpu.memory_space<vmem>>, vector<1x4x256xf32>
    %1 = vector.shape_cast %0 : vector<1x4x256xf32> to vector<4x256xf32>
    %c0_2 = arith.constant 0 : index
    %c0_3 = arith.constant 0 : index
    %2 = vector.load %arg3[%c0_2, %c0_3] : memref<4x4xf32, #tpu.memory_space<vmem>>, vector<4x4xf32>
    %cst = arith.constant dense<0.000000e+00> : vector<4x256xf32>
    %3 = tpu.matmul %2, %1, %cst {dimension_numbers = #tpu.dot_dimension_numbers<[1], [0], [0], [1], [0, 0, 1, 1], [], []>} : vector<4x4xf32>, vector<4x256xf32>, vector<4x256xf32> -> vector<4x256xf32>
    %c0_4 = arith.constant 0 : index
    %c0_5 = arith.constant 0 : index
    %4 = vector.load %arg4[%c0_4, %c0_5] : memref<8x4xf32, #tpu.memory_space<vmem>>, vector<8x4xf32>
    %cst_6 = arith.constant dense<0.000000e+00> : vector<8x256xf32>
    %5 = tpu.matmul %4, %3, %cst_6 {dimension_numbers = #tpu.dot_dimension_numbers<[1], [0], [0], [1], [0, 0, 1, 1], [], []>} : vector<8x4xf32>, vector<4x256xf32>, vector<8x256xf32> -> vector<8x256xf32>
    %c0_7 = arith.constant 0 : index
    %c0_8 = arith.constant 0 : index
    %c0_9 = arith.constant 0 : index
    %6 = vector.load %arg5[%c0_7, %c0_8, %c0_9] : memref<1x8x256xf32, #tpu.memory_space<vmem>>, vector<1x8x256xf32>
    %7 = vector.shape_cast %6 : vector<1x8x256xf32> to vector<8x256xf32>
    %8 = vector.shape_cast %5 : vector<8x256xf32> to vector<1x8x256xf32>
    tpu.vector_store %arg5[%c0_7, %c0_8, %c0_9], %8 {strides = array<i32>} : memref<1x8x256xf32, #tpu.memory_space<vmem>>, vector<1x8x256xf32>,
    return
  }
  func.func @transform_0(%arg0: i32, %arg1: i32) -> (i32, i32, i32) {
    %c0_i32 = arith.constant 0 : i32
    %c0_i32_0 = arith.constant 0 : i32
    return %arg0, %c0_i32, %arg1 : i32, i32, i32
  }
  func.func @transform_1(%arg0: i32, %arg1: i32) -> (i32, i32) {
    %c0_i32 = arith.constant 0 : i32
    %c0_i32_0 = arith.constant 0 : i32
    %c0_i32_1 = arith.constant 0 : i32
    return %c0_i32, %c0_i32_0 : i32, i32
  }
  func.func @transform_2(%arg0: i32, %arg1: i32) -> (i32, i32) {
    %c0_i32 = arith.constant 0 : i32
    %c0_i32_0 = arith.constant 0 : i32
    %c0_i32_1 = arith.constant 0 : i32
    return %c0_i32, %c0_i32_0 : i32, i32
  }
  func.func @transform_3(%arg0: i32, %arg1: i32) -> (i32, i32, i32) {
    %c0_i32 = arith.constant 0 : i32
    %c0_i32_0 = arith.constant 0 : i32
    return %arg0, %c0_i32, %arg1 : i32, i32, i32
  }
}

</mosaic_0001>

<llo_original>
// kernel: tpu_custom_call.1
$region0: #{tpu_custom_call.1}
  #allocation0 [shape = 'u32[]', space=smem, size = 0x4, offset = 0x4, fixed_abs, tag = 'smem constant byte address 0x4 - core index']
  #allocation1 [shape = 'u32[144,128]{1,0:T(1,128)}', space=vmem, size = 0x12000, scoped, tag = 'internal scratch']
  %s0 = inlined_call_operand.hbm [shape: f32[2,4,256], index: 0, kind: input, shape index: {}]
  %s1 = inlined_call_operand.vmem [shape: f32[4,4], index: 1, kind: input, shape index: {}]
  %s2 = inlined_call_operand.vmem [shape: f32[8,4], index: 2, kind: input, shape index: {}]
  %s3 = inlined_call_operand.hbm [shape: f32[2,8,256], index: 3, kind: output, shape index: {}]
  %s4 = sld [smem:[#allocation0]]
  $region49: #{tpu_custom_call.1} parent=0
    _
  %s6 = ssub.s32 1, %s4
  %s7 = scalar_select 0, %s6, %s4
  $region1: #{tpu_custom_call.1} parent=0
    #allocation2 [shape = 'u8[8192]{0}', space=vmem, size = 0x2000, scoped, tag = 'input window, operand 0']
    #allocation3 [shape = 's32[2]{0}', space=sflag, size = 0x8, scoped, tag = 'scoped memory for tpu_custom_call.1']
    #allocation4 [shape = 's32[2]{0}', space=sflag, size = 0x8, scoped, tag = 'scoped memory for tpu_custom_call.1']
    #allocation5 [shape = 'u8[16384]{0}', space=vmem, size = 0x4000, scoped, tag = 'output window, operand 0']
    %8 = vsyncpa [#allocation3], 0
    %s9 = scalar_lea.sflag [#allocation3], 1
    %10 = vsyncpa %s9, 0
    %11 = vsyncpa [#allocation4], 0
    %s12 = scalar_lea.sflag [#allocation4], 1
    %13 = vsyncpa %s12, 0
    loop: start=0, step=1, limit=4
    $region2: #{tpu_custom_call.1} parent=1 // loop_pre_header
      _
    $region3: #{tpu_custom_call.1} parent=1 // loop_header
      %s15 = sphi 0, %s19
      %p16 = scmp.ge.s32.totalorder %s15, 4
      %s22 = sphi 0, %s34
      %s23 = sphi 0, %s30
      %s24 = sphi 0, %s22
      %s25 = sphi 0, %s23
      %s26 = sphi 0, %s24
      %s27 = sphi 0, %s25
      %s39 = sphi 0, %s41
      %s42 = sphi 0, %s39
      %s43 = sphi 0, %s42
      %s59 = sphi 0, %s43
      %s63 = sphi 0, %s63
      %s65 = sphi 0, %s63
      %s66 = sphi 0, %s65
      %s80 = sphi 0, %s66
      %s84 = sphi 0, %s84
      %s86 = sphi 0, %s84
      %s87 = sphi 0, %s86
      %s101 = sphi 0, %s87
      %s109 = sphi 0, %s111
      %s112 = sphi 0, %s109
      %s113 = sphi 0, %s112
      %s129 = sphi 0, %s113
    $region4: #{tpu_custom_call.1} parent=1 // loop_header_branch
      %18 = sbr.rel (%p16) target = $region8
    $region5: #{tpu_custom_call.1} parent=1 // loop_body
      %s20 = ssub.s32 %s15, 1
      %s21 = ssub.s32 %s15, 2
      %s28 = sadd.s32 1, %s23
      %p29 = scmp.ge.s32.totalorder %s28, 1
      %s30 = scalar_select %p29, 0, %s28
      %s31 = sadd.s32 1, %s22
      %s32 = scalar_select %p29, %s31, %s22
      %p33 = scmp.ge.s32.totalorder %s32, 2
      %s34 = scalar_select %p33, 0, %s32
      %s35 = ssub.s32 %s22, %s34
      %s36 = ssub.s32 %s23, %s30
      %s37 = sor.u32 %s35, %s36
      %p38 = scmp.eq.s32.totalorder %s37, 0
      %s40 = sadd.s32 %s39, 1
      %s41 = scalar_select %p38, %s39, %s40
      %p44 = pneg %p38
      %p45 = scmp.eq.s32.totalorder %s15, 1
      %p46 = por %p44, %p45
      %p47 = scmp.ne.s32.totalorder %s39, %s42
      %p48 = scmp.eq.s32.totalorder %s15, 0
      %p49 = por %p47, %p48
      %p50 = scmp.ne.s32.totalorder %s39, %s42
      %p51 = scmp.eq.s32.totalorder %s20, 1
      %p52 = por %p50, %p51
      %p53 = scmp.ne.s32.totalorder %s42, %s43
      %p54 = scmp.eq.s32.totalorder %s20, 0
      %p55 = por %p53, %p54
      %p56 = scmp.ne.s32.totalorder %s42, %s43
      %p57 = scmp.eq.s32.totalorder %s21, 1
      %p58 = por %p56, %p57
      %p60 = scmp.ne.s32.totalorder %s43, %s59
      %p61 = scmp.eq.s32.totalorder %s21, 0
      %p62 = por %p60, %p61
      %s64 = sadd.s32 %s63, 1
      %p67 = scmp.eq.s32.totalorder %s15, 1
      %p68 = scmp.ne.s32.totalorder %s63, %s65
      %p69 = scmp.eq.s32.totalorder %s15, 0
      %p70 = por %p68, %p69
      %p71 = scmp.ne.s32.totalorder %s63, %s65
      %p72 = scmp.eq.s32.totalorder %s20, 1
      %p73 = por %p71, %p72
      %p74 = scmp.ne.s32.totalorder %s65, %s66
      %p75 = scmp.eq.s32.totalorder %s20, 0
      %p76 = por %p74, %p75
      %p77 = scmp.ne.s32.totalorder %s65, %s66
      %p78 = scmp.eq.s32.totalorder %s21, 1
      %p79 = por %p77, %p78
      %p81 = scmp.ne.s32.totalorder %s66, %s80
      %p82 = scmp.eq.s32.totalorder %s21, 0
      %p83 = por %p81, %p82
      %s85 = sadd.s32 %s84, 1
      %p88 = scmp.eq.s32.totalorder %s15, 1
      %p89 = scmp.ne.s32.totalorder %s84, %s86
      %p90 = scmp.eq.s32.totalorder %s15, 0
      %p91 = por %p89, %p90
      %p92 = scmp.ne.s32.totalorder %s84, %s86
      %p93 = scmp.eq.s32.totalorder %s20, 1
      %p94 = por %p92, %p93
      %p95 = scmp.ne.s32.totalorder %s86, %s87
      %p96 = scmp.eq.s32.totalorder %s20, 0
      %p97 = por %p95, %p96
      %p98 = scmp.ne.s32.totalorder %s86, %s87
      %p99 = scmp.eq.s32.totalorder %s21, 1
      %p100 = por %p98, %p99
      %p102 = scmp.ne.s32.totalorder %s87, %s101
      %p103 = scmp.eq.s32.totalorder %s21, 0
      %p104 = por %p102, %p103
      %s105 = ssub.s32 %s22, %s34
      %s106 = ssub.s32 %s23, %s30
      %s107 = sor.u32 %s105, %s106
      %p108 = scmp.eq.s32.totalorder %s107, 0
      %s110 = sadd.s32 %s109, 1
      %s111 = scalar_select %p108, %s109, %s110
      %p114 = pneg %p108
      %p115 = scmp.eq.s32.totalorder %s15, 1
      %p116 = por %p114, %p115
      %p117 = scmp.ne.s32.totalorder %s109, %s112
      %p118 = scmp.eq.s32.totalorder %s15, 0
      %p119 = por %p117, %p118
      %p120 = scmp.ne.s32.totalorder %s109, %s112
      %p121 = scmp.eq.s32.totalorder %s20, 1
      %p122 = por %p120, %p121
      %p123 = scmp.ne.s32.totalorder %s112, %s113
      %p124 = scmp.eq.s32.totalorder %s20, 0
      %p125 = por %p123, %p124
      %p126 = scmp.ne.s32.totalorder %s112, %s113
      %p127 = scmp.eq.s32.totalorder %s21, 1
      %p128 = por %p126, %p127
      %p130 = scmp.ne.s32.totalorder %s113, %s129
      %p131 = scmp.eq.s32.totalorder %s21, 0
      %p132 = por %p130, %p131
      %p133 = scmp.le.s32.totalorder 1, %s15
      %p134 = scmp.lt.s32.totalorder %s15, 3
      %p135 = pnand %p133, %p134
      %p136 = pneg %p135
      // Predicated region
      $region9: #{tpu_custom_call.1} parent=5 // pred_check
        _
      $region10: #{tpu_custom_call.1} parent=5 // pred_check_branch
        %138 = sbr.rel (%p135) target = $region12
      $region11: #{tpu_custom_call.1} parent=5 // pred_region
        %s139 = ssub.s32 %s15, 1
        // Predicated region
        $region13: #{tpu_custom_call.1} parent=11 // pred_check
          %p140 = pneg %p76
        $region14: #{tpu_custom_call.1} parent=11 // pred_check_branch
          %142 = sbr.rel (%p140) target = $region16
        $region15: #{tpu_custom_call.1} parent=11 // pred_region
          _
        $region16: #{tpu_custom_call.1} parent=11 // pred_fallthru
          _
        // Predicated region
        $region17: #{tpu_custom_call.1} parent=11 // pred_check
          %p143 = pneg %p97
        $region18: #{tpu_custom_call.1} parent=11 // pred_check_branch
          %145 = sbr.rel (%p143) target = $region20
        $region19: #{tpu_custom_call.1} parent=11 // pred_region
          _
        $region20: #{tpu_custom_call.1} parent=11 // pred_fallthru
          _
      $region12: #{tpu_custom_call.1} parent=5 // pred_fallthru
        _
      %p146 = scmp.lt.s32.totalorder %s15, 2
      // Predicated region
      $region21: #{tpu_custom_call.1} parent=5 // pred_check
        %p147 = pneg %p146
      $region22: #{tpu_custom_call.1} parent=5 // pred_check_branch
        %149 = sbr.rel (%p147) target = $region24
      $region23: #{tpu_custom_call.1} parent=5 // pred_region
        // Predicated region
        $region25: #{tpu_custom_call.1} parent=23 // pred_check
          %p150 = pneg %p49
        $region26: #{tpu_custom_call.1} parent=23 // pred_check_branch
          %152 = sbr.rel (%p150) target = $region28
        $region27: #{tpu_custom_call.1} parent=23 // pred_region
          %s153 = sand.u32 %s39, 1
          %s154 = scalar_lea.sflag [#allocation3], %s153
          %s155 = sand.u32 %s39, 1
          %s156 = smul.addr %s155, 8
          %s157 = scalar_lea.vmem [#allocation2], %s156
          %s158 = smul.u32 2, %s23
          %s160 = ssub.s32 128, 128
          %161 = vsyncadd %s154, %s160
          %s162 = smul.addr %s22, 2
          %s163 = sadd.s32 %s158, %s162
          %s164 = smul.addr %s163, 64
          %s165 = scalar_lea.hbm %s0, %s164
          %s167 = sshll.u32 %s157, 4
          %s168 = int_to_ptr.vmem [resolvable:$true] %s167
          %170 = dma.hbm_to_vmem [thread:$0]  %s165, 128, %s168, %s154
        $region28: #{tpu_custom_call.1} parent=23 // pred_fallthru
          _
      $region24: #{tpu_custom_call.1} parent=5 // pred_fallthru
        _
      %p171 = scmp.le.s32.totalorder 1, %s15
      %p172 = scmp.lt.s32.totalorder %s15, 3
      %p173 = pnand %p171, %p172
      %p174 = pneg %p173
      // Predicated region
      $region29: #{tpu_custom_call.1} parent=5 // pred_check
        _
      $region30: #{tpu_custom_call.1} parent=5 // pred_check_branch
        %176 = sbr.rel (%p173) target = $region32
      $region31: #{tpu_custom_call.1} parent=5 // pred_region
        %s177 = ssub.s32 %s15, 1
        %s178 = sand.u32 %s42, 1
        %s179 = scalar_lea.sflag [#allocation3], %s178
        %s180 = sand.u32 %s42, 1
        %s181 = smul.addr %s180, 8
        %s182 = scalar_lea.vmem [#allocation2], %s181
        // Predicated region
        $region33: #{tpu_custom_call.1} parent=31 // pred_check
          %p183 = pneg %p55
        $region34: #{tpu_custom_call.1} parent=31 // pred_check_branch
          %185 = sbr.rel (%p183) target = $region36
        $region35: #{tpu_custom_call.1} parent=31 // pred_region
          %186 = dma.done %s179, 128
        $region36: #{tpu_custom_call.1} parent=31 // pred_fallthru
          _
        %s187 = sand.u32 %s42, 1
        %s188 = scalar_lea.sflag [#allocation3], %s187
        %s189 = sand.u32 %s42, 1
        %s190 = smul.addr %s189, 8
        %s191 = scalar_lea.vmem [#allocation2], %s190
        %p192 = pneg %p55
        %p193 = pneg %p52
        %p194 = pneg %p76
        %p195 = pneg %p73
        %p196 = pneg %p97
        %p197 = pneg %p94
        %p198 = pneg %p125
        %p199 = pneg %p122
        %s200 = sand.u32 %s112, 1
        %s201 = scalar_lea.sflag [#allocation4], %s200
        %s202 = sand.u32 %s112, 1
        %s203 = smul.addr %s202, 16
        %s204 = scalar_lea.vmem [#allocation5], %s203
        %s205 = smul.u32 2, %s25
        %s206 = smul.u32 2, %s25
        %v207 = vld [vmem:[%s182] sm:$0xff]
        %v208 = vld [vmem:[%s1] sm:$0xf]
        %v210 = vcombine.high %v207, %v207
        %vm211 = vcmask 31744
        %v213 = vsel %vm211, %v208, 0
        %vm215 = vcmask 1043456
        %v216 = vsel %vm215, %v207, 0
        %v218 = vsel %vm215, %v210, 0
        %220 = vmatprep.subr.mxu0 %v218
        %221 = vmatpush1.msra.mxu0 %v216
        %222 = vmatprep.subr.mxu0 0.0
        %223 = vmatpush1.msra.mxu0 0.0
        %224 = vmatprep.subr.mxu0 0.0
        %225 = vmatpush1.msra.mxu0 0.0
        %226 = vmatprep.subr.mxu0 0.0
        %227 = vmatpush1.msra.mxu0 0.0
        %228 = vmatprep.subr.mxu0 0.0
        %229 = vmatpush1.msra.mxu0 0.0
        %230 = vmatprep.subr.mxu0 0.0
        %231 = vmatpush1.msra.mxu0 0.0
        %232 = vmatprep.subr.mxu0 0.0
        %233 = vmatpush1.msra.mxu0 0.0
        %234 = vmatprep.subr.mxu0 0.0
        %235 = vmatpush1.msra.mxu0 0.0
        %236 = vmatprep.subr.mxu0 0.0
        %237 = vmatpush1.msra.mxu0 0.0
        %238 = vmatprep.subr.mxu0 0.0
        %239 = vmatpush1.msra.mxu0 0.0
        %240 = vmatprep.subr.mxu0 0.0
        %241 = vmatpush1.msra.mxu0 0.0
        %242 = vmatprep.subr.mxu0 0.0
        %243 = vmatpush1.msra.mxu0 0.0
        %244 = vmatprep.subr.mxu0 0.0
        %245 = vmatpush1.msra.mxu0 0.0
        %246 = vmatprep.subr.mxu0 0.0
        %247 = vmatpush1.msra.mxu0 0.0
        %248 = vmatprep.subr.mxu0 0.0
        %249 = vmatpush1.msra.mxu0 0.0
        %250 = vmatprep.subr.mxu0 0.0
        %251 = vmatpush1.msra.mxu0 0.0
        %252 = vmatprep.subr.mxu0 0.0
        %253 = vmatpush1.msra.mxu0 0.0
        %254 = vmatprep.subr.mxu0 0.0
        %255 = vmatpush1.msra.mxu0 0.0
        %256 = vmatprep.subr.mxu0 0.0
        %257 = vmatpush1.msra.mxu0 0.0
        %258 = vmatprep.subr.mxu0 0.0
        %259 = vmatpush1.msra.mxu0 0.0
        %260 = vmatprep.subr.mxu0 0.0
        %261 = vmatpush1.msra.mxu0 0.0
        %262 = vmatprep.subr.mxu0 0.0
        %263 = vmatpush1.msra.mxu0 0.0
        %264 = vmatprep.subr.mxu0 0.0
        %265 = vmatpush1.msra.mxu0 0.0
        %266 = vmatprep.subr.mxu0 0.0
        %267 = vmatpush1.msra.mxu0 0.0
        %268 = vmatprep.subr.mxu0 0.0
        %269 = vmatpush1.msra.mxu0 0.0
        %270 = vmatprep.subr.mxu0 0.0
        %271 = vmatpush1.msra.mxu0 0.0
        %272 = vmatprep.subr.mxu0 0.0
        %273 = vmatpush1.msra.mxu0 0.0
        %274 = vmatprep.subr.mxu0 0.0
        %275 = vmatpush1.msra.mxu0 0.0
        %276 = vmatprep.subr.mxu0 0.0
        %277 = vmatpush1.msra.mxu0 0.0
        %278 = vmatprep.subr.mxu0 0.0
        %279 = vmatpush1.msra.mxu0 0.0
        %280 = vmatprep.subr.mxu0 0.0
        %281 = vmatpush1.msra.mxu0 0.0
        %282 = vmatprep.subr.mxu0 0.0
        %283 = vmatpush1.msra.mxu0 0.0
        %284 = vmatprep.mubr.f32.mxu0 0.0
        %285 = vmatmul.mubr.f32.gmra.mrb[0].mxu0 %v213
        %v286 = vpop.f32.mrb[0].mxu0
        %v287 = vadd.f32 0.0, %v286
        %v288 = vpop.f32.mrb[0].mxu0
        %v289 = vadd.f32 0.0, %v288
        %290 = vdwg.mxu0
        %v291 = vld [vmem:[%s2] sm:$0xff]
        %v293 = vsel %vm211, %v291, 0
        %v296 = vsel %vm215, %v287, 0
        %v299 = vsel %vm215, %v289, 0
        %301 = vmatprep.subr.mxu0 %v299
        %302 = vmatpush1.msra.mxu0 %v296
        %303 = vmatprep.subr.mxu0 0.0
        %304 = vmatpush1.msra.mxu0 0.0
        %305 = vmatprep.subr.mxu0 0.0
        %306 = vmatpush1.msra.mxu0 0.0
        %307 = vmatprep.subr.mxu0 0.0
        %308 = vmatpush1.msra.mxu0 0.0
        %309 = vmatprep.subr.mxu0 0.0
        %310 = vmatpush1.msra.mxu0 0.0
        %311 = vmatprep.subr.mxu0 0.0
        %312 = vmatpush1.msra.mxu0 0.0
        %313 = vmatprep.subr.mxu0 0.0
        %314 = vmatpush1.msra.mxu0 0.0
        %315 = vmatprep.subr.mxu0 0.0
        %316 = vmatpush1.msra.mxu0 0.0
        %317 = vmatprep.subr.mxu0 0.0
        %318 = vmatpush1.msra.mxu0 0.0
        %319 = vmatprep.subr.mxu0 0.0
        %320 = vmatpush1.msra.mxu0 0.0
        %321 = vmatprep.subr.mxu0 0.0
        %322 = vmatpush1.msra.mxu0 0.0
        %323 = vmatprep.subr.mxu0 0.0
        %324 = vmatpush1.msra.mxu0 0.0
        %325 = vmatprep.subr.mxu0 0.0
        %326 = vmatpush1.msra.mxu0 0.0
        %327 = vmatprep.subr.mxu0 0.0
        %328 = vmatpush1.msra.mxu0 0.0
        %329 = vmatprep.subr.mxu0 0.0
        %330 = vmatpush1.msra.mxu0 0.0
        %331 = vmatprep.subr.mxu0 0.0
        %332 = vmatpush1.msra.mxu0 0.0
        %333 = vmatprep.subr.mxu0 0.0
        %334 = vmatpush1.msra.mxu0 0.0
        %335 = vmatprep.subr.mxu0 0.0
        %336 = vmatpush1.msra.mxu0 0.0
        %337 = vmatprep.subr.mxu0 0.0
        %338 = vmatpush1.msra.mxu0 0.0
        %339 = vmatprep.subr.mxu0 0.0
        %340 = vmatpush1.msra.mxu0 0.0
        %341 = vmatprep.subr.mxu0 0.0
        %342 = vmatpush1.msra.mxu0 0.0
        %343 = vmatprep.subr.mxu0 0.0
        %344 = vmatpush1.msra.mxu0 0.0
        %345 = vmatprep.subr.mxu0 0.0
        %346 = vmatpush1.msra.mxu0 0.0
        %347 = vmatprep.subr.mxu0 0.0
        %348 = vmatpush1.msra.mxu0 0.0
        %349 = vmatprep.subr.mxu0 0.0
        %350 = vmatpush1.msra.mxu0 0.0
        %351 = vmatprep.subr.mxu0 0.0
        %352 = vmatpush1.msra.mxu0 0.0
        %353 = vmatprep.subr.mxu0 0.0
        %354 = vmatpush1.msra.mxu0 0.0
        %355 = vmatprep.subr.mxu0 0.0
        %356 = vmatpush1.msra.mxu0 0.0
        %357 = vmatprep.subr.mxu0 0.0
        %358 = vmatpush1.msra.mxu0 0.0
        %359 = vmatprep.subr.mxu0 0.0
        %360 = vmatpush1.msra.mxu0 0.0
        %361 = vmatprep.subr.mxu0 0.0
        %362 = vmatpush1.msra.mxu0 0.0
        %363 = vmatprep.subr.mxu0 0.0
        %364 = vmatpush1.msra.mxu0 0.0
        %365 = vmatprep.mubr.f32.mxu0 0.0
        %366 = vmatmul.mubr.f32.gmra.mrb[0].mxu0 %v293
        %v367 = vpop.f32.mrb[0].mxu0
        %v368 = vadd.f32 0.0, %v367
        %v369 = vpop.f32.mrb[0].mxu0
        %v370 = vadd.f32 0.0, %v369
        %371 = vdwg.mxu0
        %372 = vst [vmem:[%s204] sm:$0xff] %v368
        %373 = vst [vmem:[%s204 + $0x8] sm:$0xff] %v370
        %s374 = sand.u32 %s112, 1
        %s375 = scalar_lea.sflag [#allocation4], %s374
        %s376 = sand.u32 %s112, 1
        %s377 = smul.addr %s376, 16
        %s378 = scalar_lea.vmem [#allocation5], %s377
        // Predicated region
        $region37: #{tpu_custom_call.1} parent=31 // pred_check
          %p379 = pneg %p122
        $region38: #{tpu_custom_call.1} parent=31 // pred_check_branch
          %381 = sbr.rel (%p379) target = $region40
        $region39: #{tpu_custom_call.1} parent=31 // pred_region
          %s382 = smul.u32 2, %s25
          %s384 = ssub.s32 256, 256
          %385 = vsyncadd %s375, %s384
          %s386 = smul.addr %s24, 2
          %s387 = sadd.s32 %s382, %s386
          %s388 = smul.addr %s387, 128
          %s389 = scalar_lea.hbm %s3, %s388
          %s391 = sshll.u32 %s378, 4
          %s392 = int_to_ptr.vmem [resolvable:$true] %s391
          %394 = dma.vmem_to_hbm [thread:$0]  %s392, 256, %s389, %s375
        $region40: #{tpu_custom_call.1} parent=31 // pred_fallthru
          _
      $region32: #{tpu_custom_call.1} parent=5 // pred_fallthru
        _
      %p395 = scmp.le.s32.totalorder 2, %s15
      // Predicated region
      $region41: #{tpu_custom_call.1} parent=5 // pred_check
        %p396 = pneg %p395
      $region42: #{tpu_custom_call.1} parent=5 // pred_check_branch
        %398 = sbr.rel (%p396) target = $region44
      $region43: #{tpu_custom_call.1} parent=5 // pred_region
        %s399 = ssub.s32 %s15, 2
        // Predicated region
        $region45: #{tpu_custom_call.1} parent=43 // pred_check
          %p400 = pneg %p128
        $region46: #{tpu_custom_call.1} parent=43 // pred_check_branch
          %402 = sbr.rel (%p400) target = $region48
        $region47: #{tpu_custom_call.1} parent=43 // pred_region
          %s403 = sand.u32 %s113, 1
          %s404 = scalar_lea.sflag [#allocation4], %s403
          %s405 = sand.u32 %s113, 1
          %s406 = smul.addr %s405, 16
          %s407 = scalar_lea.vmem [#allocation5], %s406
          %408 = dma.done %s404, 256
        $region48: #{tpu_custom_call.1} parent=43 // pred_fallthru
          _
      $region44: #{tpu_custom_call.1} parent=5 // pred_fallthru
        _
    $region6: #{tpu_custom_call.1} parent=1 // loop_footer
      %s19 = sadd.s32 1, %s15
    $region7: #{tpu_custom_call.1} parent=1 // loop_footer_branch
      %14 = sbr.rel target = $region3
    $region8: #{tpu_custom_call.1} parent=1 // loop_exit
      _
    %409 = vsyncpa [#allocation3], 1
    %s410 = scalar_lea.sflag [#allocation3], 1
    %411 = vsyncpa %s410, 1
    %412 = vsyncpa [#allocation4], 1
    %s413 = scalar_lea.sflag [#allocation4], 1
    %414 = vsyncpa %s413, 1

</llo_original>
